<compile_context>
chip_gen: v7x
topology: tpu7x:2x2x1
jax: 0.10.0
libtpu: 0.0.40
codegen_flags: <defaults>
</compile_context>

<pallas_src>
import jax
import jax.numpy as jnp
from jax import lax
from jax.experimental import pallas as pl
from jax.experimental.pallas import tpu as pltpu

_LANE = 128


def _round_up(n, m):
    return ((n + m - 1) // m) * m


def critic_kernel(x_ref, w1_ref, bw_ref, b2_ref, out_ref):
    # x_ref : (TB, S)  natural rollout layout; the only per-step moving tensor
    # w1_ref: (H, S)   resident (PyTorch nn.Linear weight layout)
    # bw_ref: (H, 2)   resident; col 0 = b1, col 1 = state_value weight w2
    # b2_ref: (1, 1)   SMEM scalar
    # out_ref:(1, TB)  lane-dense value row
    #
    # linear_in + ReLU, computed transposed so the batch stays on lanes:
    #   hT[h, b] = relu(sum_s W1[h, s] * x[b, s] + b1[h])
    hT = lax.dot_general(
        w1_ref[...], x_ref[...],
        dimension_numbers=(((1,), (1,)), ((), ())),
        preferred_element_type=jnp.float32)                      # (H, TB)
    hT = jnp.maximum(hT + bw_ref[:, 0:1], 0.0)
    # state_value head: VPU multiply + cross-sublane reduction (no width-1
    # matmul -- that would burn an entire MXU pass for one output column).
    v = jnp.sum(hT * bw_ref[:, 1:2], axis=0, keepdims=True) + b2_ref[0, 0]
    out_ref[...] = v.astype(out_ref.dtype)


def critic_forward(x, w1, b1, w2, b2, *, block_b=8192):
    """value = relu(x @ w1.T + b1) @ w2.T + b2.

    x : (B, S) float32 or bfloat16
    w1: (H, S), b1: (H,)   -- nn.Linear(state_space, hidden) layout
    w2: (1, H), b2: (1,)   -- nn.Linear(hidden, 1) layout
    Returns (B, 1) float32.
    """
    B, S = x.shape
    H = w1.shape[0]

    # x is the only batch-scaled HBM stream.  If the caller already stores it
    # in bf16, keep it (halves the dominant read); otherwise stay f32.  Never
    # add a standalone convert pass in the wrapper (it re-adds an HBM pass).
    cdt = jnp.bfloat16 if x.dtype == jnp.bfloat16 else jnp.float32
    xc = x.astype(cdt)
    w1c = w1.astype(cdt)

    # Post-matmul operands stay f32 (the accumulator is f32 regardless).
    bw = jnp.concatenate(
        [b1.reshape(H, 1).astype(jnp.float32),
         w2.reshape(H, 1).astype(jnp.float32)], axis=1)          # (H, 2)
    b2c = b2.reshape(1, 1).astype(jnp.float32)                    # SMEM scalar

    # Batch tile: lane-dense multiple of 128, large (default 8K) to amortize
    # the ~0.35 us per-grid-step overhead, capped at ceil(B/2) so the grid has
    # at least 2 steps for v7x's two TensorCores.
    cap = _round_up(max(block_b, _LANE), _LANE)
    half = _round_up(pl.cdiv(B, 2), _LANE)
    bb = max(_LANE, min(cap, half))
    # Ragged last block: OOB input reads padded, OOB output writes masked.
    grid = (pl.cdiv(B, bb),)

    out = pl.pallas_call(
        critic_kernel,
        out_shape=jax.ShapeDtypeStruct((1, B), jnp.float32),
        grid=grid,
        in_specs=[
            pl.BlockSpec((bb, S), lambda i: (i, 0)),             # x tile (moves)
            pl.BlockSpec((H, S), lambda i: (0, 0)),              # w1 resident
            pl.BlockSpec((H, 2), lambda i: (0, 0)),              # b1|w2 resident
            pl.BlockSpec(memory_space=pltpu.MemorySpace.SMEM),   # b2 scalar
        ],
        out_specs=pl.BlockSpec((1, bb), lambda i: (0, i)),       # lane-dense out
        compiler_params=pltpu.CompilerParams(
            dimension_semantics=("parallel",)),
    )(xc, w1c, bw, b2c)

    return out.reshape(B, 1)


def init_critic_params(key, state_space, hidden_size=64):
    """Deterministic synthetic init in native nn.Linear layouts.

    linear_in  : weight (hidden, state_space), bias (hidden,)
    state_value: weight (1, hidden),           bias (1,)
    """
    k1, k2, k3, k4 = jax.random.split(key, 4)
    lim1 = 1.0 / jnp.sqrt(state_space)
    lim2 = 1.0 / jnp.sqrt(hidden_size)
    w1 = jax.random.uniform(k1, (hidden_size, state_space), jnp.float32, -lim1, lim1)
    b1 = jax.random.uniform(k2, (hidden_size,), jnp.float32, -lim1, lim1)
    w2 = jax.random.uniform(k3, (1, hidden_size), jnp.float32, -lim2, lim2)
    b2 = jax.random.uniform(k4, (1,), jnp.float32, -lim2, lim2)
    return w1, b1, w2, b2


if __name__ == "__main__":
    key = jax.random.PRNGKey(0)
    k_x, k_p = jax.random.split(key)

    batch = 8
    state_space = 16
    hidden_size = 64

    x = jax.random.normal(k_x, (batch, state_space), jnp.float32)
    w1, b1, w2, b2 = init_critic_params(k_p, state_space, hidden_size)

    value = critic_forward(x, w1, b1, w2, b2)
    value = jax.block_until_ready(value)

    # Reference check in plain JAX (same math as the PyTorch module).
    ref = jnp.maximum(x @ w1.T + b1, 0.0) @ w2.T + b2
    assert value.shape == (batch, 1)
    assert jnp.allclose(value, ref, atol=1e-5, rtol=1e-5)

    print("KERNEL_OK")
</pallas_src>

<mosaic_0001>
module attributes {stable_mosaic.version = 11 : i64} {
  func.func @critic_kernel(%arg0: i32, %arg1: memref<128x16xf32, #tpu.memory_space<vmem>>, %arg2: memref<64x16xf32, #tpu.memory_space<vmem>>, %arg3: memref<64x2xf32, #tpu.memory_space<vmem>>, %arg4: memref<1x1xf32, #tpu.memory_space<smem>>, %arg5: memref<1x128xf32, #tpu.memory_space<vmem>>) attributes {dimension_semantics = [#tpu.dimension_semantics<parallel>], iteration_bounds = array<i64: 1>, scalar_prefetch = 0 : i64, scratch_operands = 0 : i64, tpu.core_type = #tpu.core_type<tc>, window_params = [{transform_indices = @transform_0, window_bounds = array<i64: 128, 16>}, {pipeline_mode = #tpu.pipeline_mode<synchronous>, transform_indices = @transform_1, window_bounds = array<i64: 64, 16>}, {pipeline_mode = #tpu.pipeline_mode<synchronous>, transform_indices = @transform_2, window_bounds = array<i64: 64, 2>}, {transform_indices = @transform_3, window_bounds = array<i64: 1, 1>}, {transform_indices = @transform_4, window_bounds = array<i64: 1, 128>}]} {
    %c0 = arith.constant 0 : index
    %c0_0 = arith.constant 0 : index
    %0 = vector.load %arg2[%c0, %c0_0] : memref<64x16xf32, #tpu.memory_space<vmem>>, vector<64x16xf32>
    %c0_1 = arith.constant 0 : index
    %c0_2 = arith.constant 0 : index
    %1 = vector.load %arg1[%c0_1, %c0_2] : memref<128x16xf32, #tpu.memory_space<vmem>>, vector<128x16xf32>
    %cst = arith.constant dense<0.000000e+00> : vector<64x128xf32>
    %2 = tpu.matmul %0, %1, %cst {dimension_numbers = #tpu.dot_dimension_numbers<[1], [1], [0], [0], [0, 0, 1, 0], [], []>} : vector<64x16xf32>, vector<128x16xf32>, vector<64x128xf32> -> vector<64x128xf32>
    %c0_3 = arith.constant 0 : index
    %c0_4 = arith.constant 0 : index
    %3 = vector.load %arg3[%c0_3, %c0_4] : memref<64x2xf32, #tpu.memory_space<vmem>>, vector<64x1xf32>
    %4 = vector.broadcast %3 : vector<64x1xf32> to vector<64x128xf32>
    %5 = arith.addf %2, %4 : vector<64x128xf32>
    %cst_5 = arith.constant 0.000000e+00 : f32
    %6 = vector.broadcast %cst_5 : f32 to vector<64x128xf32>
    %7 = arith.maximumf %5, %6 : vector<64x128xf32>
    %c0_6 = arith.constant 0 : index
    %c1 = arith.constant 1 : index
    %8 = vector.load %arg3[%c0_6, %c1] : memref<64x2xf32, #tpu.memory_space<vmem>>, vector<64x1xf32>
    %9 = vector.broadcast %8 : vector<64x1xf32> to vector<64x128xf32>
    %10 = arith.mulf %7, %9 : vector<64x128xf32>
    %cst_7 = arith.constant dense<0.000000e+00> : vector<128xf32>
    %11 = vector.multi_reduction <add>, %10, %cst_7 [0] : vector<64x128xf32> to vector<128xf32>
    %12 = vector.shape_cast %11 : vector<128xf32> to vector<1x128xf32>
    %c0_8 = arith.constant 0 : index
    %c0_9 = arith.constant 0 : index
    %13 = memref.load %arg4[%c0_8, %c0_9] : memref<1x1xf32, #tpu.memory_space<smem>>
    %14 = vector.broadcast %13 : f32 to vector<1x128xf32>
    %15 = arith.addf %12, %14 : vector<1x128xf32>
    %c0_10 = arith.constant 0 : index
    %c0_11 = arith.constant 0 : index
    %16 = vector.load %arg5[%c0_10, %c0_11] : memref<1x128xf32, #tpu.memory_space<vmem>>, vector<1x128xf32>
    tpu.vector_store %arg5[%c0_10, %c0_11], %15 {strides = array<i32>} : memref<1x128xf32, #tpu.memory_space<vmem>>, vector<1x128xf32>,
    return
  }
  func.func @transform_0(%arg0: i32) -> (i32, i32) {
    %c0_i32 = arith.constant 0 : i32
    %c0_i32_0 = arith.constant 0 : i32
    return %arg0, %c0_i32 : i32, i32
  }
  func.func @transform_1(%arg0: i32) -> (i32, i32) {
    %c0_i32 = arith.constant 0 : i32
    %c0_i32_0 = arith.constant 0 : i32
    %c0_i32_1 = arith.constant 0 : i32
    return %c0_i32, %c0_i32_0 : i32, i32
  }
  func.func @transform_2(%arg0: i32) -> (i32, i32) {
    %c0_i32 = arith.constant 0 : i32
    %c0_i32_0 = arith.constant 0 : i32
    %c0_i32_1 = arith.constant 0 : i32
    return %c0_i32, %c0_i32_0 : i32, i32
  }
  func.func @transform_3(%arg0: i32) -> (i32, i32) {
    %c0_i32 = arith.constant 0 : i32
    %c0_i32_0 = arith.constant 0 : i32
    %c0_i32_1 = arith.constant 0 : i32
    return %c0_i32, %c0_i32_0 : i32, i32
  }
  func.func @transform_4(%arg0: i32) -> (i32, i32) {
    %c0_i32 = arith.constant 0 : i32
    %c0_i32_0 = arith.constant 0 : i32
    return %c0_i32, %arg0 : i32, i32
  }
}

</mosaic_0001>

<llo_original>
// kernel: tpu_custom_call.1
$region0: #{tpu_custom_call.1}
  #allocation0 [shape = 'u32[]', space=smem, size = 0x4, offset = 0x4, fixed_abs, tag = 'smem constant byte address 0x4 - core index']
  #allocation1 [shape = 'u32[144,128]{1,0:T(1,128)}', space=vmem, size = 0x12000, scoped, tag = 'internal scratch']
  #allocation2 [shape = 'f32[1,1]{1,0:T(1,128)S(6)}', space=smem, size = 0x200, scoped, tag = 'scoped memory for tpu_custom_call.1']
  %s0 = inlined_call_operand.vmem [shape: f32[8,16], index: 0, kind: input, shape index: {}]
  %s1 = inlined_call_operand.vmem [shape: f32[64,16], index: 1, kind: input, shape index: {}]
  %s2 = inlined_call_operand.vmem [shape: f32[64,2], index: 2, kind: input, shape index: {}]
  %s3 = inlined_call_operand.<no memory space> [shape: f32[1,1], index: 3, kind: input, shape index: {}]
  %s4 = inlined_call_operand.hbm [shape: f32[1,8], index: 4, kind: output, shape index: {}]
  %s5 = sld [smem:[#allocation0]]
  $region26: #{tpu_custom_call.1} parent=0
    _
  %s7 = ssub.s32 1, %s5
  %s8 = scalar_select 0, %s7, %s5
  %9 = sst [smem:[#allocation2]] %s3
  $region1: #{tpu_custom_call.1} parent=0
    #allocation3 [shape = 'u8[512]{0}', space=vmem, size = 0x400, scoped, tag = 'output window, operand 0, single buffered']
    #allocation4 [shape = 's32[1]{0}', space=sflag, size = 0x4, scoped, tag = 'scoped memory for tpu_custom_call.1']
    %10 = vsyncpa [#allocation4], 0
    // Predicated region
    $region2: #{tpu_custom_call.1} parent=1 // pred_check
      _
    $region3: #{tpu_custom_call.1} parent=1 // pred_check_branch
      %12 = sbr.rel (0) target = $region5
    $region4: #{tpu_custom_call.1} parent=1 // pred_region
      _
    $region5: #{tpu_custom_call.1} parent=1 // pred_fallthru
      _
    // Predicated region
    $region6: #{tpu_custom_call.1} parent=1 // pred_check
      _
    $region7: #{tpu_custom_call.1} parent=1 // pred_check_branch
      %14 = sbr.rel (0) target = $region9
    $region8: #{tpu_custom_call.1} parent=1 // pred_region
      _
    $region9: #{tpu_custom_call.1} parent=1 // pred_fallthru
      _
    // Predicated region
    $region10: #{tpu_custom_call.1} parent=1 // pred_check
      _
    $region11: #{tpu_custom_call.1} parent=1 // pred_check_branch
      %16 = sbr.rel (0) target = $region13
    $region12: #{tpu_custom_call.1} parent=1 // pred_region
      _
    $region13: #{tpu_custom_call.1} parent=1 // pred_fallthru
      _
    // Predicated region
    $region14: #{tpu_custom_call.1} parent=1 // pred_check
      _
    $region15: #{tpu_custom_call.1} parent=1 // pred_check_branch
      %18 = sbr.rel (0) target = $region17
    $region16: #{tpu_custom_call.1} parent=1 // pred_region
      _
    $region17: #{tpu_custom_call.1} parent=1 // pred_fallthru
      _
    %v19 = vld [vmem:[%s1] sm:$0xff]
    %v20 = vld [vmem:[%s1 + $0x8] sm:$0xff]
    %v21 = vld [vmem:[%s1 + $0x10] sm:$0xff]
    %v22 = vld [vmem:[%s1 + $0x18] sm:$0xff]
    %v23 = vld [vmem:[%s1 + $0x20] sm:$0xff]
    %v24 = vld [vmem:[%s1 + $0x28] sm:$0xff]
    %v25 = vld [vmem:[%s1 + $0x30] sm:$0xff]
    %v26 = vld [vmem:[%s1 + $0x38] sm:$0xff]
    %v27 = vld [vmem:[%s0] sm:$0xff]
    %v28 = vld [vmem:[%s0 + $0x8] sm:$0xff]
    %v29 = vld [vmem:[%s0 + $0x10] sm:$0xff]
    %v30 = vld [vmem:[%s0 + $0x18] sm:$0xff]
    %v31 = vld [vmem:[%s0 + $0x20] sm:$0xff]
    %v32 = vld [vmem:[%s0 + $0x28] sm:$0xff]
    %v33 = vld [vmem:[%s0 + $0x30] sm:$0xff]
    %v34 = vld [vmem:[%s0 + $0x38] sm:$0xff]
    %v35 = vld [vmem:[%s0 + $0x40] sm:$0xff]
    %v36 = vld [vmem:[%s0 + $0x48] sm:$0xff]
    %v37 = vld [vmem:[%s0 + $0x50] sm:$0xff]
    %v38 = vld [vmem:[%s0 + $0x58] sm:$0xff]
    %v39 = vld [vmem:[%s0 + $0x60] sm:$0xff]
    %v40 = vld [vmem:[%s0 + $0x68] sm:$0xff]
    %v41 = vld [vmem:[%s0 + $0x70] sm:$0xff]
    %v42 = vld [vmem:[%s0 + $0x78] sm:$0xff]
    %v43 = vld [vmem:[%s2] sm:$0xff]
    %v44 = vld [vmem:[%s2 + $0x8] sm:$0xff]
    %v45 = vld [vmem:[%s2 + $0x10] sm:$0xff]
    %v46 = vld [vmem:[%s2 + $0x18] sm:$0xff]
    %v47 = vld [vmem:[%s2 + $0x20] sm:$0xff]
    %v48 = vld [vmem:[%s2 + $0x28] sm:$0xff]
    %v49 = vld [vmem:[%s2 + $0x30] sm:$0xff]
    %v50 = vld [vmem:[%s2 + $0x38] sm:$0xff]
    %52 = vset.pattern.permute.xlu0 0
    %53 = vperm.xlu0 %52, %v43
    %v54 = vpop.permute.xlu0 %53
    %57 = vset.pattern.permute.xlu0 0
    %58 = vperm.xlu0 %57, %v44
    %v59 = vpop.permute.xlu0 %58
    %62 = vset.pattern.permute.xlu0 0
    %63 = vperm.xlu0 %62, %v45
    %v64 = vpop.permute.xlu0 %63
    %67 = vset.pattern.permute.xlu0 0
    %68 = vperm.xlu0 %67, %v46
    %v69 = vpop.permute.xlu0 %68
    %72 = vset.pattern.permute.xlu0 0
    %73 = vperm.xlu0 %72, %v47
    %v74 = vpop.permute.xlu0 %73
    %77 = vset.pattern.permute.xlu0 0
    %78 = vperm.xlu0 %77, %v48
    %v79 = vpop.permute.xlu0 %78
    %82 = vset.pattern.permute.xlu0 0
    %83 = vperm.xlu0 %82, %v49
    %v84 = vpop.permute.xlu0 %83
    %87 = vset.pattern.permute.xlu0 0
    %88 = vperm.xlu0 %87, %v50
    %v89 = vpop.permute.xlu0 %88
    %vm91 = vcmask 130048
    %v93 = vsel %vm91, %v19, 0
    %v96 = vsel %vm91, %v20, 0
    %v99 = vsel %vm91, %v21, 0
    %v102 = vsel %vm91, %v22, 0
    %v105 = vsel %vm91, %v23, 0
    %v108 = vsel %vm91, %v24, 0
    %v111 = vsel %vm91, %v25, 0
    %v114 = vsel %vm91, %v26, 0
    %v117 = vsel %vm91, %v27, 0
    %v120 = vsel %vm91, %v28, 0
    %v123 = vsel %vm91, %v29, 0
    %v126 = vsel %vm91, %v30, 0
    %v129 = vsel %vm91, %v31, 0
    %v132 = vsel %vm91, %v32, 0
    %v135 = vsel %vm91, %v33, 0
    %v138 = vsel %vm91, %v34, 0
    %v141 = vsel %vm91, %v35, 0
    %v144 = vsel %vm91, %v36, 0
    %v147 = vsel %vm91, %v37, 0
    %v150 = vsel %vm91, %v38, 0
    %v153 = vsel %vm91, %v39, 0
    %v156 = vsel %vm91, %v40, 0
    %v159 = vsel %vm91, %v41, 0
    %v162 = vsel %vm91, %v42, 0
    %164 = vmatprep.subr.mxu0 0.0
    %165 = vmatpush1.xpose.msra.mxu0 %v117
    %166 = vmatprep.subr.mxu0 0.0
    %167 = vmatpush1.xpose.msra.mxu0 %v120
    %168 = vmatprep.subr.mxu0 0.0
    %169 = vmatpush1.xpose.msra.mxu0 %v123
    %170 = vmatprep.subr.mxu0 0.0
    %171 = vmatpush1.xpose.msra.mxu0 %v126
    %172 = vmatprep.subr.mxu0 0.0
    %173 = vmatpush1.xpose.msra.mxu0 %v129
    %174 = vmatprep.subr.mxu0 0.0
    %175 = vmatpush1.xpose.msra.mxu0 %v132
    %176 = vmatprep.subr.mxu0 0.0
    %177 = vmatpush1.xpose.msra.mxu0 %v135
    %178 = vmatprep.subr.mxu0 0.0
    %179 = vmatpush1.xpose.msra.mxu0 %v138
    %180 = vmatprep.subr.mxu0 0.0
    %181 = vmatpush1.xpose.msra.mxu0 %v141
    %182 = vmatprep.subr.mxu0 0.0
    %183 = vmatpush1.xpose.msra.mxu0 %v144
    %184 = vmatprep.subr.mxu0 0.0
    %185 = vmatpush1.xpose.msra.mxu0 %v147
    %186 = vmatprep.subr.mxu0 0.0
    %187 = vmatpush1.xpose.msra.mxu0 %v150
    %188 = vmatprep.subr.mxu0 0.0
    %189 = vmatpush1.xpose.msra.mxu0 %v153
    %190 = vmatprep.subr.mxu0 0.0
    %191 = vmatpush1.xpose.msra.mxu0 %v156
    %192 = vmatprep.subr.mxu0 0.0
    %193 = vmatpush1.xpose.msra.mxu0 %v159
    %194 = vmatprep.subr.mxu0 0.0
    %195 = vmatpush1.xpose.msra.mxu0 %v162
    %196 = vmatprep.subr.mxu0 0.0
    %197 = vmatpush1.xpose.msra.mxu0 0.0
    %198 = vmatprep.subr.mxu0 0.0
    %199 = vmatpush1.xpose.msra.mxu0 0.0
    %200 = vmatprep.subr.mxu0 0.0
    %201 = vmatpush1.xpose.msra.mxu0 0.0
    %202 = vmatprep.subr.mxu0 0.0
    %203 = vmatpush1.xpose.msra.mxu0 0.0
    %204 = vmatprep.subr.mxu0 0.0
    %205 = vmatpush1.xpose.msra.mxu0 0.0
    %206 = vmatprep.subr.mxu0 0.0
    %207 = vmatpush1.xpose.msra.mxu0 0.0
    %208 = vmatprep.subr.mxu0 0.0
    %209 = vmatpush1.xpose.msra.mxu0 0.0
    %210 = vmatprep.subr.mxu0 0.0
    %211 = vmatpush1.xpose.msra.mxu0 0.0
    %212 = vmatprep.subr.mxu0 0.0
    %213 = vmatpush1.xpose.msra.mxu0 0.0
    %214 = vmatprep.subr.mxu0 0.0
    %215 = vmatpush1.xpose.msra.mxu0 0.0
    %216 = vmatprep.subr.mxu0 0.0
    %217 = vmatpush1.xpose.msra.mxu0 0.0
    %218 = vmatprep.subr.mxu0 0.0
    %219 = vmatpush1.xpose.msra.mxu0 0.0
    %220 = vmatprep.subr.mxu0 0.0
    %221 = vmatpush1.xpose.msra.mxu0 0.0
    %222 = vmatprep.subr.mxu0 0.0
    %223 = vmatpush1.xpose.msra.mxu0 0.0
    %224 = vmatprep.subr.mxu0 0.0
    %225 = vmatpush1.xpose.msra.mxu0 0.0
    %226 = vmatprep.subr.mxu0 0.0
    %227 = vmatpush1.xpose.msra.mxu0 0.0
    %228 = vmatprep.mubr.f32.mxu0 0.0
    %229 = vmatmul.mubr.f32.gmra.mrb[0].mxu0 %v93
    %v230 = vpop.f32.mrb[0].mxu0
    %v231 = vadd.f32 %v54, %v230
    %v232 = vpop.f32.mrb[0].mxu0
    %233 = vmatprep.mubr.f32.mxu0 0.0
    %234 = vmatmul.mubr.f32.gmra.mrb[0].mxu0 %v96
    %v235 = vpop.f32.mrb[0].mxu0
    %v236 = vadd.f32 %v59, %v235
    %v237 = vpop.f32.mrb[0].mxu0
    %238 = vmatprep.mubr.f32.mxu0 0.0
    %239 = vmatmul.mubr.f32.gmra.mrb[0].mxu0 %v99
    %v240 = vpop.f32.mrb[0].mxu0
    %v241 = vadd.f32 %v64, %v240
    %v242 = vpop.f32.mrb[0].mxu0
    %243 = vmatprep.mubr.f32.mxu0 0.0
    %244 = vmatmul.mubr.f32.gmra.mrb[0].mxu0 %v102
    %v245 = vpop.f32.mrb[0].mxu0
    %v246 = vadd.f32 %v69, %v245
    %v247 = vpop.f32.mrb[0].mxu0
    %248 = vmatprep.mubr.f32.mxu0 0.0
    %249 = vmatmul.mubr.f32.gmra.mrb[0].mxu0 %v105
    %v250 = vpop.f32.mrb[0].mxu0
    %v251 = vadd.f32 %v74, %v250
    %v252 = vpop.f32.mrb[0].mxu0
    %253 = vmatprep.mubr.f32.mxu0 0.0
    %254 = vmatmul.mubr.f32.gmra.mrb[0].mxu0 %v108
    %v255 = vpop.f32.mrb[0].mxu0
    %v256 = vadd.f32 %v79, %v255
    %v257 = vpop.f32.mrb[0].mxu0
    %258 = vmatprep.mubr.f32.mxu0 0.0
    %259 = vmatmul.mubr.f32.gmra.mrb[0].mxu0 %v111
    %v260 = vpop.f32.mrb[0].mxu0
    %v261 = vadd.f32 %v84, %v260
    %v262 = vpop.f32.mrb[0].mxu0
    %263 = vmatprep.mubr.f32.mxu0 0.0
    %264 = vmatmul.mubr.f32.gmra.mrb[0].mxu0 %v114
    %v265 = vpop.f32.mrb[0].mxu0
    %v266 = vadd.f32 %v89, %v265
    %v267 = vpop.f32.mrb[0].mxu0
    %268 = vdwg.mxu0
    %v269 = vmax.f32 %v231, 0.0
    %v270 = vmax.f32 %v236, 0.0
    %v271 = vmax.f32 %v241, 0.0
    %v272 = vmax.f32 %v246, 0.0
    %v273 = vmax.f32 %v251, 0.0
    %v274 = vmax.f32 %v256, 0.0
    %v275 = vmax.f32 %v261, 0.0
    %v276 = vmax.f32 %v266, 0.0
    %277 = vset.pattern.permute.xlu0 1
    %278 = vperm.xlu0 %277, %v43
    %v279 = vpop.permute.xlu0 %278
    %281 = vset.pattern.permute.xlu0 1
    %282 = vperm.xlu0 %281, %v44
    %v283 = vpop.permute.xlu0 %282
    %285 = vset.pattern.permute.xlu0 1
    %286 = vperm.xlu0 %285, %v45
    %v287 = vpop.permute.xlu0 %286
    %289 = vset.pattern.permute.xlu0 1
    %290 = vperm.xlu0 %289, %v46
    %v291 = vpop.permute.xlu0 %290
    %293 = vset.pattern.permute.xlu0 1
    %294 = vperm.xlu0 %293, %v47
    %v295 = vpop.permute.xlu0 %294
    %297 = vset.pattern.permute.xlu0 1
    %298 = vperm.xlu0 %297, %v48
    %v299 = vpop.permute.xlu0 %298
    %301 = vset.pattern.permute.xlu0 1
    %302 = vperm.xlu0 %301, %v49
    %v303 = vpop.permute.xlu0 %302
    %305 = vset.pattern.permute.xlu0 1
    %306 = vperm.xlu0 %305, %v50
    %v307 = vpop.permute.xlu0 %306
    %v309 = vmul.f32 %v269, %v279
    %v310 = vmul.f32 %v270, %v283
    %v311 = vmul.f32 %v271, %v287
    %v312 = vmul.f32 %v272, %v291
    %v313 = vmul.f32 %v273, %v295
    %v314 = vmul.f32 %v274, %v299
    %v315 = vmul.f32 %v275, %v303
    %v316 = vmul.f32 %v276, %v307
    %v317 = vadd.f32 %v309, %v310
    %v318 = vadd.f32 %v317, %v311
    %v319 = vadd.f32 %v318, %v312
    %v320 = vadd.f32 %v319, %v313
    %v321 = vadd.f32 %v320, %v314
    %v322 = vadd.f32 %v321, %v315
    %v323 = vadd.f32 %v322, %v316
    %v324 = vrot.slane %v323, 4
    %v325 = vadd.f32 %v323, %v324
    %v326 = vrot.slane %v325, 2
    %v327 = vadd.f32 %v325, %v326
    %v328 = vrot.slane %v327, 1
    %v329 = vadd.f32 %v327, %v328
    %s330 = sld [smem:[#allocation2]]
    %v331 = vstv %s330
    %v332 = vadd.f32 %v329, %v331
    %333 = vst [vmem:[#allocation3] sm:$0x1] %v332
    // Predicated region
    $region18: #{tpu_custom_call.1} parent=1 // pred_check
      _
    $region19: #{tpu_custom_call.1} parent=1 // pred_check_branch
      %335 = sbr.rel (0) target = $region21
    $region20: #{tpu_custom_call.1} parent=1 // pred_region
      %s337 = ssub.s32 16, 16
      %338 = vsyncadd [#allocation4], %s337
      %s340 = sshll.u32 [#allocation3], 4
      %s341 = int_to_ptr.vmem [resolvable:$true] %s340
      %343 = dma.vmem_to_hbm [thread:$0]  %s341, 16, %s4, [#allocation4]
    $region21: #{tpu_custom_call.1} parent=1 // pred_fallthru
      _
    // Predicated region
    $region22: #{tpu_custom_call.1} parent=1 // pred_check
      _
    $region23: #{tpu_custom_call.1} parent=1 // pred_check_branch
      %345 = sbr.rel (0) target = $region25
    $region24: #{tpu_custom_call.1} parent=1 // pred_region
      %346 = dma.done [#allocation4], 16
    $region25: #{tpu_custom_call.1} parent=1 // pred_fallthru
      _
    %347 = vsyncpa [#allocation4], 1

</llo_original>
